<compile_context>
chip_gen: v7x
topology: tpu7x:2x2x1
jax: 0.10.0
libtpu: 0.0.40
codegen_flags: <defaults>
</compile_context>

<pallas_src>
import functools

import jax
import jax.numpy as jnp
from jax import lax
from jax.experimental import pallas as pl
from jax.experimental.pallas import tpu as pltpu

EPS = 1e-5  # nn.BatchNorm2d default eps


def _fused_conv_bn_kernel(x_ref, w_ref, g_ref, b_ref, o_ref,
                          sum_ref, ssq_ref, scale_ref, bias_ref, *, count, eps):
    """Grid = (phase, image, spatial_tile).

    phase 0: accumulate per-channel sum / sum-of-squares of the conv output.
    phase 1: recompute the conv and apply the folded BN scale/bias.
    """
    phase = pl.program_id(0)
    n = pl.program_id(1)
    s = pl.program_id(2)
    first = jnp.logical_and(n == 0, s == 0)

    # 1x1 conv for one (image, spatial-tile): (Cout_p, Cin) @ (Cin, T) -> (Cout_p, T).
    # bf16 operands feed the native MXU path; accumulation stays in f32.
    y = jnp.dot(w_ref[...].astype(jnp.bfloat16),
                x_ref[...].astype(jnp.bfloat16),
                preferred_element_type=jnp.float32)

    @pl.when(phase == 0)
    def _accumulate_stats():
        @pl.when(first)
        def _init():
            sum_ref[...] = jnp.zeros_like(sum_ref)
            ssq_ref[...] = jnp.zeros_like(ssq_ref)

        sum_ref[...] += jnp.sum(y, axis=-1, keepdims=True)
        ssq_ref[...] += jnp.sum(y * y, axis=-1, keepdims=True)

    @pl.when(phase == 1)
    def _normalize():
        @pl.when(first)
        def _fold_bn():
            # Fold BN into a single per-channel scale/bias, computed exactly once.
            inv_n = 1.0 / count
            mean = sum_ref[...] * inv_n
            var = ssq_ref[...] * inv_n - mean * mean  # biased variance (train-mode BN)
            scale = g_ref[...] * lax.rsqrt(var + eps)
            scale_ref[...] = scale
            bias_ref[...] = b_ref[...] - mean * scale

        o_ref[...] = (y * scale_ref[...] + bias_ref[...]).astype(o_ref.dtype)


def _vmem_limit_bytes():
    # Derive the VMEM budget per generation (v7x: 64 MiB physical, v5e/v6e: 128 MiB).
    try:
        cap = int(pltpu.get_tpu_info().vmem_capacity_bytes)
    except Exception:
        cap = 64 * 1024 * 1024
    return min(cap * 3 // 4, 96 * 1024 * 1024)


def shortcut_connection(x_nchw, weight, gamma, beta, *, stride=1):
    """weight: (Cout, Cin, 1, 1) like nn.Conv2d; gamma/beta: (Cout,). Returns NCHW."""
    N, Cin, H, W = x_nchw.shape
    Cout = weight.shape[0]
    out_dtype = x_nchw.dtype

    # A 1x1 conv's stride is pure spatial subsampling.  When a slice copy is
    # unavoidable (stride > 1) fuse the bf16 downcast into it; otherwise keep x
    # untouched in HBM (zero wrapper passes) and cast tiles in-kernel.
    if stride > 1:
        xs = x_nchw[:, :, ::stride, ::stride].astype(jnp.bfloat16)
    else:
        xs = x_nchw
    Ho, Wo = xs.shape[2], xs.shape[3]
    HW = Ho * Wo
    x3 = xs.reshape(N, Cin, HW)  # contiguous NCHW reshape: no transpose, no copy

    # Pad Cout to a sublane multiple (a no-op for typical channel counts); the
    # padding only touches the tiny weight / gamma / beta arrays, never x.
    Cout_p = ((Cout + 7) // 8) * 8
    w2 = weight.reshape(Cout, Cin).astype(jnp.bfloat16)
    g2 = gamma.astype(jnp.float32)
    b2 = beta.astype(jnp.float32)
    if Cout_p != Cout:
        w2 = jnp.pad(w2, ((0, Cout_p - Cout), (0, 0)))
        g2 = jnp.pad(g2, (0, Cout_p - Cout), constant_values=1.0)
        b2 = jnp.pad(b2, (0, Cout_p - Cout))
    g2 = g2.reshape(Cout_p, 1)
    b2 = b2.reshape(Cout_p, 1)

    # Spatial tiling: keep whole images as one lane-dense tile when they fit the VMEM
    # budget (no padding, no extra HBM pass); otherwise split into multiple-of-128
    # lane chunks and zero-pad the tail.  Zero columns are statistics-neutral because
    # the exact (unpadded) pixel count is baked into the kernel.
    vmem_limit = _vmem_limit_bytes()
    x_bytes = jnp.dtype(x3.dtype).itemsize
    o_bytes = jnp.dtype(out_dtype).itemsize
    # per-lane VMEM footprint: double-buffered x block + double-buffered out block
    # + headroom for the f32 intermediate y.
    per_lane = 2 * Cin * x_bytes + 2 * Cout_p * o_bytes + 2 * Cout_p * 4
    t_cap = max(128, (vmem_limit // 2) // per_lane)
    if HW <= t_cap:
        T = HW
        HW_pad = HW
    else:
        T = (t_cap // 128) * 128
        HW_pad = ((HW + T - 1) // T) * T
        if HW_pad != HW:
            x3 = jnp.pad(x3, ((0, 0), (0, 0), (0, HW_pad - HW)))
    S = HW_pad // T

    count = float(N * HW)  # exact pixel count per channel (spatial padding is zeros)
    grid = (2, N, S)       # (phase, image, spatial tile)

    out3 = pl.pallas_call(
        functools.partial(_fused_conv_bn_kernel, count=count, eps=EPS),
        out_shape=jax.ShapeDtypeStruct((N, Cout_p, HW_pad), out_dtype),
        grid_spec=pltpu.PrefetchScalarGridSpec(
            num_scalar_prefetch=0,
            grid=grid,
            in_specs=[
                pl.BlockSpec((None, Cin, T), lambda p, n, s: (n, 0, s)),   # x tile
                pl.BlockSpec((Cout_p, Cin), lambda p, n, s: (0, 0)),       # weight (resident)
                pl.BlockSpec((Cout_p, 1), lambda p, n, s: (0, 0)),         # gamma  (resident)
                pl.BlockSpec((Cout_p, 1), lambda p, n, s: (0, 0)),         # beta   (resident)
            ],
            # Output parks on block 0 during phase 0 (no HBM write-back), then streams
            # one block per step in phase 1 -> each output block hits HBM exactly once.
            out_specs=pl.BlockSpec((None, Cout_p, T),
                                   lambda p, n, s: (n * p, 0, s * p)),
            scratch_shapes=[
                pltpu.VMEM((Cout_p, 1), jnp.float32),  # per-channel sum
                pltpu.VMEM((Cout_p, 1), jnp.float32),  # per-channel sum of squares
                pltpu.VMEM((Cout_p, 1), jnp.float32),  # folded scale
                pltpu.VMEM((Cout_p, 1), jnp.float32),  # folded bias
            ],
        ),
        compiler_params=pltpu.CompilerParams(
            # All axes must run sequentially: phase 1 consumes the stats that the
            # VMEM scratch accumulated over the whole of phase 0.
            dimension_semantics=("arbitrary", "arbitrary", "arbitrary"),
            vmem_limit_bytes=vmem_limit,
        ),
    )(x3, w2, g2, b2)

    # Drop channel / spatial padding (no-ops in the common case) and un-flatten.
    return out3[:, :Cout, :HW].reshape(N, Cout, Ho, Wo)


def _reference(x, weight, gamma, beta, stride):
    # pure-JAX reference (train-mode BN, biased variance), with the same bf16
    # rounding of the matmul operands that the kernel uses.
    Cout, Cin = weight.shape[0], weight.shape[1]
    xs = x[:, :, ::stride, ::stride]
    xb = xs.astype(jnp.bfloat16).astype(jnp.float32)
    wb = weight.reshape(Cout, Cin).astype(jnp.bfloat16).astype(jnp.float32)
    y = jnp.einsum("nchw,oc->nohw", xb, wb)
    mean = y.mean(axis=(0, 2, 3), keepdims=True)
    var = y.var(axis=(0, 2, 3), keepdims=True)
    return (y - mean) / jnp.sqrt(var + EPS) * gamma.reshape(1, -1, 1, 1) + beta.reshape(
        1, -1, 1, 1
    )


if __name__ == "__main__":
    # small shapes consistent with the module
    N, Cin, H, W = 2, 4, 16, 16
    Cout = 8

    key = jax.random.PRNGKey(0)
    kx, kw, kg, kb = jax.random.split(key, 4)
    x = jax.random.normal(kx, (N, Cin, H, W), dtype=jnp.float32)
    weight = jax.random.normal(kw, (Cout, Cin, 1, 1), dtype=jnp.float32) * 0.1
    gamma = 1.0 + 0.1 * jax.random.normal(kg, (Cout,), dtype=jnp.float32)
    beta = 0.1 * jax.random.normal(kb, (Cout,), dtype=jnp.float32)

    for stride in (2, 1):
        out = shortcut_connection(x, weight, gamma, beta, stride=stride)
        out = jax.block_until_ready(out)
        ref = _reference(x, weight, gamma, beta, stride)
        assert out.shape == (N, Cout, H // stride, W // stride), out.shape
        assert jnp.allclose(out, ref, atol=1e-4, rtol=1e-4), (
            stride, float(jnp.max(jnp.abs(out - ref))))

    print("KERNEL_OK")
</pallas_src>

<mosaic_0001>
module attributes {stable_mosaic.version = 11 : i64} {
  func.func @_fused_conv_bn_kernel(%arg0: i32, %arg1: i32, %arg2: i32, %arg3: memref<1x4x64xbf16, #tpu.memory_space<vmem>>, %arg4: memref<8x4xbf16, #tpu.memory_space<vmem>>, %arg5: memref<8x1xf32, #tpu.memory_space<vmem>>, %arg6: memref<8x1xf32, #tpu.memory_space<vmem>>, %arg7: memref<1x8x64xf32, #tpu.memory_space<vmem>>, %arg8: memref<8x1xf32, #tpu.memory_space<vmem>>, %arg9: memref<8x1xf32, #tpu.memory_space<vmem>>, %arg10: memref<8x1xf32, #tpu.memory_space<vmem>>, %arg11: memref<8x1xf32, #tpu.memory_space<vmem>>) attributes {dimension_semantics = [#tpu.dimension_semantics<arbitrary>, #tpu.dimension_semantics<arbitrary>, #tpu.dimension_semantics<arbitrary>], iteration_bounds = array<i64: 2, 2, 1>, scalar_prefetch = 0 : i64, scratch_operands = 4 : i64, tpu.core_type = #tpu.core_type<tc>, window_params = [{transform_indices = @transform_0, window_bounds = array<i64: 1, 4, 64>}, {pipeline_mode = #tpu.pipeline_mode<synchronous>, transform_indices = @transform_1, window_bounds = array<i64: 8, 4>}, {pipeline_mode = #tpu.pipeline_mode<synchronous>, transform_indices = @transform_2, window_bounds = array<i64: 8, 1>}, {pipeline_mode = #tpu.pipeline_mode<synchronous>, transform_indices = @transform_3, window_bounds = array<i64: 8, 1>}, {transform_indices = @transform_4, window_bounds = array<i64: 1, 8, 64>}]} {
    %c0_i32 = arith.constant 0 : i32
    %0 = arith.cmpi eq, %arg1, %c0_i32 : i32
    %c0_i32_0 = arith.constant 0 : i32
    %1 = arith.cmpi eq, %arg2, %c0_i32_0 : i32
    %2 = arith.andi %0, %1 : i1
    %c0 = arith.constant 0 : index
    %c0_1 = arith.constant 0 : index
    %3 = vector.load %arg4[%c0, %c0_1] : memref<8x4xbf16, #tpu.memory_space<vmem>>, vector<8x4xbf16>
    %c0_2 = arith.constant 0 : index
    %c0_3 = arith.constant 0 : index
    %c0_4 = arith.constant 0 : index
    %4 = vector.load %arg3[%c0_2, %c0_3, %c0_4] : memref<1x4x64xbf16, #tpu.memory_space<vmem>>, vector<1x4x64xbf16>
    %5 = vector.shape_cast %4 : vector<1x4x64xbf16> to vector<4x64xbf16>
    %cst = arith.constant dense<0.000000e+00> : vector<8x64xf32>
    %6 = tpu.matmul %3, %5, %cst {dimension_numbers = #tpu.dot_dimension_numbers<[1], [0], [0], [1], [0, 0, 1, 1], [], []>} : vector<8x4xbf16>, vector<4x64xbf16>, vector<8x64xf32> -> vector<8x64xf32>
    %c0_i32_5 = arith.constant 0 : i32
    %7 = arith.cmpi eq, %arg0, %c0_i32_5 : i32
    %8 = arith.extui %7 : i1 to i32
    %c0_i32_6 = arith.constant 0 : i32
    %9 = arith.cmpi ne, %8, %c0_i32_6 : i32
    scf.if %9 {
      %13 = arith.extui %2 : i1 to i32
      %c0_i32_8 = arith.constant 0 : i32
      %14 = arith.cmpi ne, %13, %c0_i32_8 : i32
      scf.if %14 {
        %cst_19 = arith.constant 0.000000e+00 : f32
        %26 = vector.broadcast %cst_19 : f32 to vector<8x1xf32>
        %c0_20 = arith.constant 0 : index
        %c0_21 = arith.constant 0 : index
        %27 = vector.load %arg8[%c0_20, %c0_21] : memref<8x1xf32, #tpu.memory_space<vmem>>, vector<8x1xf32>
        tpu.vector_store %arg8[%c0_20, %c0_21], %26 {strides = array<i32>} : memref<8x1xf32, #tpu.memory_space<vmem>>, vector<8x1xf32>,
        %cst_22 = arith.constant 0.000000e+00 : f32
        %28 = vector.broadcast %cst_22 : f32 to vector<8x1xf32>
        %c0_23 = arith.constant 0 : index
        %c0_24 = arith.constant 0 : index
        %29 = vector.load %arg9[%c0_23, %c0_24] : memref<8x1xf32, #tpu.memory_space<vmem>>, vector<8x1xf32>
        tpu.vector_store %arg9[%c0_23, %c0_24], %28 {strides = array<i32>} : memref<8x1xf32, #tpu.memory_space<vmem>>, vector<8x1xf32>,
      } else {
      }
      %c0_9 = arith.constant 0 : index
      %c0_10 = arith.constant 0 : index
      %15 = vector.load %arg8[%c0_9, %c0_10] : memref<8x1xf32, #tpu.memory_space<vmem>>, vector<8x1xf32>
      %cst_11 = arith.constant dense<0.000000e+00> : vector<8xf32>
      %16 = vector.multi_reduction <add>, %6, %cst_11 [1] : vector<8x64xf32> to vector<8xf32>
      %17 = vector.shape_cast %16 : vector<8xf32> to vector<8x1xf32>
      %18 = arith.addf %15, %17 : vector<8x1xf32>
      %c0_12 = arith.constant 0 : index
      %c0_13 = arith.constant 0 : index
      %19 = vector.load %arg8[%c0_12, %c0_13] : memref<8x1xf32, #tpu.memory_space<vmem>>, vector<8x1xf32>
      tpu.vector_store %arg8[%c0_12, %c0_13], %18 {strides = array<i32>} : memref<8x1xf32, #tpu.memory_space<vmem>>, vector<8x1xf32>,
      %c0_14 = arith.constant 0 : index
      %c0_15 = arith.constant 0 : index
      %20 = vector.load %arg9[%c0_14, %c0_15] : memref<8x1xf32, #tpu.memory_space<vmem>>, vector<8x1xf32>
      %21 = arith.mulf %6, %6 : vector<8x64xf32>
      %cst_16 = arith.constant dense<0.000000e+00> : vector<8xf32>
      %22 = vector.multi_reduction <add>, %21, %cst_16 [1] : vector<8x64xf32> to vector<8xf32>
      %23 = vector.shape_cast %22 : vector<8xf32> to vector<8x1xf32>
      %24 = arith.addf %20, %23 : vector<8x1xf32>
      %c0_17 = arith.constant 0 : index
      %c0_18 = arith.constant 0 : index
      %25 = vector.load %arg9[%c0_17, %c0_18] : memref<8x1xf32, #tpu.memory_space<vmem>>, vector<8x1xf32>
      tpu.vector_store %arg9[%c0_17, %c0_18], %24 {strides = array<i32>} : memref<8x1xf32, #tpu.memory_space<vmem>>, vector<8x1xf32>,
    } else {
    }
    %c1_i32 = arith.constant 1 : i32
    %10 = arith.cmpi eq, %arg0, %c1_i32 : i32
    %11 = arith.extui %10 : i1 to i32
    %c0_i32_7 = arith.constant 0 : i32
    %12 = arith.cmpi ne, %11, %c0_i32_7 : i32
    scf.if %12 {
      %13 = arith.extui %2 : i1 to i32
      %c0_i32_8 = arith.constant 0 : i32
      %14 = arith.cmpi ne, %13, %c0_i32_8 : i32
      scf.if %14 {
        %c0_16 = arith.constant 0 : index
        %c0_17 = arith.constant 0 : index
        %24 = vector.load %arg8[%c0_16, %c0_17] : memref<8x1xf32, #tpu.memory_space<vmem>>, vector<8x1xf32>
        %cst_18 = arith.constant 7.812500e-03 : f32
        %25 = vector.broadcast %cst_18 : f32 to vector<8x1xf32>
        %26 = arith.mulf %24, %25 : vector<8x1xf32>
        %c0_19 = arith.constant 0 : index
        %c0_20 = arith.constant 0 : index
        %27 = vector.load %arg9[%c0_19, %c0_20] : memref<8x1xf32, #tpu.memory_space<vmem>>, vector<8x1xf32>
        %cst_21 = arith.constant 7.812500e-03 : f32
        %28 = vector.broadcast %cst_21 : f32 to vector<8x1xf32>
        %29 = arith.mulf %27, %28 : vector<8x1xf32>
        %30 = arith.mulf %26, %26 : vector<8x1xf32>
        %31 = arith.subf %29, %30 : vector<8x1xf32>
        %c0_22 = arith.constant 0 : index
        %c0_23 = arith.constant 0 : index
        %32 = vector.load %arg5[%c0_22, %c0_23] : memref<8x1xf32, #tpu.memory_space<vmem>>, vector<8x1xf32>
        %cst_24 = arith.constant 9.99999974E-6 : f32
        %33 = vector.broadcast %cst_24 : f32 to vector<8x1xf32>
        %34 = arith.addf %31, %33 : vector<8x1xf32>
        %35 = math.rsqrt %34 : vector<8x1xf32>
        %36 = arith.mulf %32, %35 : vector<8x1xf32>
        %c0_25 = arith.constant 0 : index
        %c0_26 = arith.constant 0 : index
        %37 = vector.load %arg10[%c0_25, %c0_26] : memref<8x1xf32, #tpu.memory_space<vmem>>, vector<8x1xf32>
        tpu.vector_store %arg10[%c0_25, %c0_26], %36 {strides = array<i32>} : memref<8x1xf32, #tpu.memory_space<vmem>>, vector<8x1xf32>,
        %c0_27 = arith.constant 0 : index
        %c0_28 = arith.constant 0 : index
        %38 = vector.load %arg6[%c0_27, %c0_28] : memref<8x1xf32, #tpu.memory_space<vmem>>, vector<8x1xf32>
        %39 = arith.mulf %26, %36 : vector<8x1xf32>
        %40 = arith.subf %38, %39 : vector<8x1xf32>
        %c0_29 = arith.constant 0 : index
        %c0_30 = arith.constant 0 : index
        %41 = vector.load %arg11[%c0_29, %c0_30] : memref<8x1xf32, #tpu.memory_space<vmem>>, vector<8x1xf32>
        tpu.vector_store %arg11[%c0_29, %c0_30], %40 {strides = array<i32>} : memref<8x1xf32, #tpu.memory_space<vmem>>, vector<8x1xf32>,
      } else {
      }
      %c0_9 = arith.constant 0 : index
      %c0_10 = arith.constant 0 : index
      %15 = vector.load %arg10[%c0_9, %c0_10] : memref<8x1xf32, #tpu.memory_space<vmem>>, vector<8x1xf32>
      %16 = vector.broadcast %15 : vector<8x1xf32> to vector<8x64xf32>
      %17 = arith.mulf %6, %16 : vector<8x64xf32>
      %c0_11 = arith.constant 0 : index
      %c0_12 = arith.constant 0 : index
      %18 = vector.load %arg11[%c0_11, %c0_12] : memref<8x1xf32, #tpu.memory_space<vmem>>, vector<8x1xf32>
      %19 = vector.broadcast %18 : vector<8x1xf32> to vector<8x64xf32>
      %20 = arith.addf %17, %19 : vector<8x64xf32>
      %c0_13 = arith.constant 0 : index
      %c0_14 = arith.constant 0 : index
      %c0_15 = arith.constant 0 : index
      %21 = vector.load %arg7[%c0_13, %c0_14, %c0_15] : memref<1x8x64xf32, #tpu.memory_space<vmem>>, vector<1x8x64xf32>
      %22 = vector.shape_cast %21 : vector<1x8x64xf32> to vector<8x64xf32>
      %23 = vector.shape_cast %20 : vector<8x64xf32> to vector<1x8x64xf32>
      tpu.vector_store %arg7[%c0_13, %c0_14, %c0_15], %23 {strides = array<i32>} : memref<1x8x64xf32, #tpu.memory_space<vmem>>, vector<1x8x64xf32>,
    } else {
    }
    return
  }
  func.func @transform_0(%arg0: i32, %arg1: i32, %arg2: i32) -> (i32, i32, i32) {
    %c0_i32 = arith.constant 0 : i32
    %c0_i32_0 = arith.constant 0 : i32
    return %arg1, %c0_i32, %arg2 : i32, i32, i32
  }
  func.func @transform_1(%arg0: i32, %arg1: i32, %arg2: i32) -> (i32, i32) {
    %c0_i32 = arith.constant 0 : i32
    %c0_i32_0 = arith.constant 0 : i32
    %c0_i32_1 = arith.constant 0 : i32
    return %c0_i32, %c0_i32_0 : i32, i32
  }
  func.func @transform_2(%arg0: i32, %arg1: i32, %arg2: i32) -> (i32, i32) {
    %c0_i32 = arith.constant 0 : i32
    %c0_i32_0 = arith.constant 0 : i32
    %c0_i32_1 = arith.constant 0 : i32
    return %c0_i32, %c0_i32_0 : i32, i32
  }
  func.func @transform_3(%arg0: i32, %arg1: i32, %arg2: i32) -> (i32, i32) {
    %c0_i32 = arith.constant 0 : i32
    %c0_i32_0 = arith.constant 0 : i32
    %c0_i32_1 = arith.constant 0 : i32
    return %c0_i32, %c0_i32_0 : i32, i32
  }
  func.func @transform_4(%arg0: i32, %arg1: i32, %arg2: i32) -> (i32, i32, i32) {
    %0 = arith.muli %arg1, %arg0 : i32
    %1 = arith.muli %arg2, %arg0 : i32
    %c0_i32 = arith.constant 0 : i32
    %c0_i32_0 = arith.constant 0 : i32
    return %0, %c0_i32, %1 : i32, i32, i32
  }
}

</mosaic_0001>

<llo_original>
// kernel: tpu_custom_call.1
$region0: #{tpu_custom_call.1}
  #allocation0 [shape = 'u32[]', space=smem, size = 0x4, offset = 0x4, fixed_abs, tag = 'smem constant byte address 0x4 - core index']
  #allocation1 [shape = 'u32[144,128]{1,0:T(1,128)}', space=vmem, size = 0x12000, scoped, tag = 'internal scratch']
  #allocation2 [shape = 'f32[8,1]{1,0:T(8,128)}', space=vmem, size = 0x1000, scoped, tag = 'scratch operand']
  #allocation3 [shape = 'f32[8,1]{1,0:T(8,128)}', space=vmem, size = 0x1000, scoped, tag = 'scratch operand']
  #allocation4 [shape = 'f32[8,1]{1,0:T(8,128)}', space=vmem, size = 0x1000, scoped, tag = 'scratch operand']
  #allocation5 [shape = 'f32[8,1]{1,0:T(8,128)}', space=vmem, size = 0x1000, scoped, tag = 'scratch operand']
  %s0 = inlined_call_operand.vmem [shape: bf16[2,4,64], index: 0, kind: input, shape index: {}]
  %s1 = inlined_call_operand.vmem [shape: bf16[8,4], index: 1, kind: input, shape index: {}]
  %s2 = inlined_call_operand.vmem [shape: f32[8,1], index: 2, kind: input, shape index: {}]
  %s3 = inlined_call_operand.vmem [shape: f32[8,1], index: 3, kind: input, shape index: {}]
  %s4 = inlined_call_operand.hbm [shape: f32[2,8,64], index: 4, kind: output, shape index: {}]
  %s5 = sld [smem:[#allocation0]]
  $region65: #{tpu_custom_call.1} parent=0
    _
  %s7 = ssub.s32 1, %s5
  %s8 = scalar_select 0, %s7, %s5
  $region1: #{tpu_custom_call.1} parent=0
    #allocation6 [shape = 'u8[8192]{0}', space=vmem, size = 0x2000, scoped, tag = 'output window, operand 0']
    #allocation7 [shape = 's32[2]{0}', space=sflag, size = 0x8, scoped, tag = 'scoped memory for tpu_custom_call.1']
    %9 = vsyncpa [#allocation7], 0
    %s10 = scalar_lea.sflag [#allocation7], 1
    %11 = vsyncpa %s10, 0
    loop: start=0, step=1, limit=6
    $region2: #{tpu_custom_call.1} parent=1 // loop_pre_header
      _
    $region3: #{tpu_custom_call.1} parent=1 // loop_header
      %s13 = sphi 0, %s17
      %p14 = scmp.ge.s32.totalorder %s13, 6
      %s20 = sphi 0, %s39
      %s21 = sphi 0, %s35
      %s22 = sphi 0, %s31
      %s23 = sphi 0, %s20
      %s24 = sphi 0, %s21
      %s25 = sphi 0, %s22
      %s26 = sphi 0, %s23
      %s27 = sphi 0, %s24
      %s28 = sphi 0, %s25
      %s44 = sphi 0, %s46
      %s47 = sphi 0, %s44
      %s48 = sphi 0, %s47
      %s64 = sphi 0, %s48
      %s68 = sphi 0, %s68
      %s70 = sphi 0, %s68
      %s71 = sphi 0, %s70
      %s85 = sphi 0, %s71
      %s89 = sphi 0, %s89
      %s91 = sphi 0, %s89
      %s92 = sphi 0, %s91
      %s106 = sphi 0, %s92
      %s110 = sphi 0, %s110
      %s112 = sphi 0, %s110
      %s113 = sphi 0, %s112
      %s127 = sphi 0, %s113
      %s139 = sphi 0, %s141
      %s142 = sphi 0, %s139
      %s143 = sphi 0, %s142
      %s159 = sphi 0, %s143
    $region4: #{tpu_custom_call.1} parent=1 // loop_header_branch
      %16 = sbr.rel (%p14) target = $region8
    $region5: #{tpu_custom_call.1} parent=1 // loop_body
      %s18 = ssub.s32 %s13, 1
      %s19 = ssub.s32 %s13, 2
      %s29 = sadd.s32 1, %s22
      %p30 = scmp.ge.s32.totalorder %s29, 1
      %s31 = scalar_select %p30, 0, %s29
      %s32 = sadd.s32 1, %s21
      %s33 = scalar_select %p30, %s32, %s21
      %p34 = scmp.ge.s32.totalorder %s33, 2
      %s35 = scalar_select %p34, 0, %s33
      %s36 = sadd.s32 1, %s20
      %s37 = scalar_select %p34, %s36, %s20
      %p38 = scmp.ge.s32.totalorder %s37, 2
      %s39 = scalar_select %p38, 0, %s37
      %s40 = ssub.s32 %s21, %s35
      %s41 = ssub.s32 %s22, %s31
      %s42 = sor.u32 %s40, %s41
      %p43 = scmp.eq.s32.totalorder %s42, 0
      %s45 = sadd.s32 %s44, 1
      %s46 = scalar_select %p43, %s44, %s45
      %p49 = pneg %p43
      %p50 = scmp.eq.s32.totalorder %s13, 3
      %p51 = por %p49, %p50
      %p52 = scmp.ne.s32.totalorder %s44, %s47
      %p53 = scmp.eq.s32.totalorder %s13, 0
      %p54 = por %p52, %p53
      %p55 = scmp.ne.s32.totalorder %s44, %s47
      %p56 = scmp.eq.s32.totalorder %s18, 3
      %p57 = por %p55, %p56
      %p58 = scmp.ne.s32.totalorder %s47, %s48
      %p59 = scmp.eq.s32.totalorder %s18, 0
      %p60 = por %p58, %p59
      %p61 = scmp.ne.s32.totalorder %s47, %s48
      %p62 = scmp.eq.s32.totalorder %s19, 3
      %p63 = por %p61, %p62
      %p65 = scmp.ne.s32.totalorder %s48, %s64
      %p66 = scmp.eq.s32.totalorder %s19, 0
      %p67 = por %p65, %p66
      %s69 = sadd.s32 %s68, 1
      %p72 = scmp.eq.s32.totalorder %s13, 3
      %p73 = scmp.ne.s32.totalorder %s68, %s70
      %p74 = scmp.eq.s32.totalorder %s13, 0
      %p75 = por %p73, %p74
      %p76 = scmp.ne.s32.totalorder %s68, %s70
      %p77 = scmp.eq.s32.totalorder %s18, 3
      %p78 = por %p76, %p77
      %p79 = scmp.ne.s32.totalorder %s70, %s71
      %p80 = scmp.eq.s32.totalorder %s18, 0
      %p81 = por %p79, %p80
      %p82 = scmp.ne.s32.totalorder %s70, %s71
      %p83 = scmp.eq.s32.totalorder %s19, 3
      %p84 = por %p82, %p83
      %p86 = scmp.ne.s32.totalorder %s71, %s85
      %p87 = scmp.eq.s32.totalorder %s19, 0
      %p88 = por %p86, %p87
      %s90 = sadd.s32 %s89, 1
      %p93 = scmp.eq.s32.totalorder %s13, 3
      %p94 = scmp.ne.s32.totalorder %s89, %s91
      %p95 = scmp.eq.s32.totalorder %s13, 0
      %p96 = por %p94, %p95
      %p97 = scmp.ne.s32.totalorder %s89, %s91
      %p98 = scmp.eq.s32.totalorder %s18, 3
      %p99 = por %p97, %p98
      %p100 = scmp.ne.s32.totalorder %s91, %s92
      %p101 = scmp.eq.s32.totalorder %s18, 0
      %p102 = por %p100, %p101
      %p103 = scmp.ne.s32.totalorder %s91, %s92
      %p104 = scmp.eq.s32.totalorder %s19, 3
      %p105 = por %p103, %p104
      %p107 = scmp.ne.s32.totalorder %s92, %s106
      %p108 = scmp.eq.s32.totalorder %s19, 0
      %p109 = por %p107, %p108
      %s111 = sadd.s32 %s110, 1
      %p114 = scmp.eq.s32.totalorder %s13, 3
      %p115 = scmp.ne.s32.totalorder %s110, %s112
      %p116 = scmp.eq.s32.totalorder %s13, 0
      %p117 = por %p115, %p116
      %p118 = scmp.ne.s32.totalorder %s110, %s112
      %p119 = scmp.eq.s32.totalorder %s18, 3
      %p120 = por %p118, %p119
      %p121 = scmp.ne.s32.totalorder %s112, %s113
      %p122 = scmp.eq.s32.totalorder %s18, 0
      %p123 = por %p121, %p122
      %p124 = scmp.ne.s32.totalorder %s112, %s113
      %p125 = scmp.eq.s32.totalorder %s19, 3
      %p126 = por %p124, %p125
      %p128 = scmp.ne.s32.totalorder %s113, %s127
      %p129 = scmp.eq.s32.totalorder %s19, 0
      %p130 = por %p128, %p129
      %s131 = smul.u32 %s21, %s20
      %s132 = smul.u32 %s22, %s20
      %s133 = smul.u32 %s35, %s39
      %s134 = smul.u32 %s31, %s39
      %s135 = ssub.s32 %s131, %s133
      %s136 = ssub.s32 %s132, %s134
      %s137 = sor.u32 %s135, %s136
      %p138 = scmp.eq.s32.totalorder %s137, 0
      %s140 = sadd.s32 %s139, 1
      %s141 = scalar_select %p138, %s139, %s140
      %p144 = pneg %p138
      %p145 = scmp.eq.s32.totalorder %s13, 3
      %p146 = por %p144, %p145
      %p147 = scmp.ne.s32.totalorder %s139, %s142
      %p148 = scmp.eq.s32.totalorder %s13, 0
      %p149 = por %p147, %p148
      %p150 = scmp.ne.s32.totalorder %s139, %s142
      %p151 = scmp.eq.s32.totalorder %s18, 3
      %p152 = por %p150, %p151
      %p153 = scmp.ne.s32.totalorder %s142, %s143
      %p154 = scmp.eq.s32.totalorder %s18, 0
      %p155 = por %p153, %p154
      %p156 = scmp.ne.s32.totalorder %s142, %s143
      %p157 = scmp.eq.s32.totalorder %s19, 3
      %p158 = por %p156, %p157
      %p160 = scmp.ne.s32.totalorder %s143, %s159
      %p161 = scmp.eq.s32.totalorder %s19, 0
      %p162 = por %p160, %p161
      %p163 = scmp.le.s32.totalorder 1, %s13
      %p164 = scmp.lt.s32.totalorder %s13, 5
      %p165 = pnand %p163, %p164
      %p166 = pneg %p165
      // Predicated region
      $region9: #{tpu_custom_call.1} parent=5 // pred_check
        _
      $region10: #{tpu_custom_call.1} parent=5 // pred_check_branch
        %168 = sbr.rel (%p165) target = $region12
      $region11: #{tpu_custom_call.1} parent=5 // pred_region
        %s169 = ssub.s32 %s13, 1
        // Predicated region
        $region13: #{tpu_custom_call.1} parent=11 // pred_check
          %p170 = pneg %p81
        $region14: #{tpu_custom_call.1} parent=11 // pred_check_branch
          %172 = sbr.rel (%p170) target = $region16
        $region15: #{tpu_custom_call.1} parent=11 // pred_region
          _
        $region16: #{tpu_custom_call.1} parent=11 // pred_fallthru
          _
        // Predicated region
        $region17: #{tpu_custom_call.1} parent=11 // pred_check
          %p173 = pneg %p102
        $region18: #{tpu_custom_call.1} parent=11 // pred_check_branch
          %175 = sbr.rel (%p173) target = $region20
        $region19: #{tpu_custom_call.1} parent=11 // pred_region
          _
        $region20: #{tpu_custom_call.1} parent=11 // pred_fallthru
          _
        // Predicated region
        $region21: #{tpu_custom_call.1} parent=11 // pred_check
          %p176 = pneg %p123
        $region22: #{tpu_custom_call.1} parent=11 // pred_check_branch
          %178 = sbr.rel (%p176) target = $region24
        $region23: #{tpu_custom_call.1} parent=11 // pred_region
          _
        $region24: #{tpu_custom_call.1} parent=11 // pred_fallthru
          _
      $region12: #{tpu_custom_call.1} parent=5 // pred_fallthru
        _
      %p179 = scmp.lt.s32.totalorder %s13, 4
      // Predicated region
      $region25: #{tpu_custom_call.1} parent=5 // pred_check
        %p180 = pneg %p179
      $region26: #{tpu_custom_call.1} parent=5 // pred_check_branch
        %182 = sbr.rel (%p180) target = $region28
      $region27: #{tpu_custom_call.1} parent=5 // pred_region
        // Predicated region
        $region29: #{tpu_custom_call.1} parent=27 // pred_check
          %p183 = pneg %p54
        $region30: #{tpu_custom_call.1} parent=27 // pred_check_branch
          %185 = sbr.rel (%p183) target = $region32
        $region31: #{tpu_custom_call.1} parent=27 // pred_region
          %p186 = scmp.lt.s32.totalorder %s21, 1
          %s187 = scalar_select %p186, %s21, 1
          %p188 = scmp.lt.s32.totalorder %s22, 0
          %s189 = scalar_select %p188, %s22, 0
          %s190 = sadd.s32 %s189, %s187
          %s191 = smul.addr %s190, 2
          %s192 = scalar_lea.vmem %s0, %s191
        $region32: #{tpu_custom_call.1} parent=27 // pred_fallthru
          _
      $region28: #{tpu_custom_call.1} parent=5 // pred_fallthru
        _
      %p193 = scmp.le.s32.totalorder 1, %s13
      %p194 = scmp.lt.s32.totalorder %s13, 5
      %p195 = pnand %p193, %p194
      %p196 = pneg %p195
      // Predicated region
      $region33: #{tpu_custom_call.1} parent=5 // pred_check
        _
      $region34: #{tpu_custom_call.1} parent=5 // pred_check_branch
        %198 = sbr.rel (%p195) target = $region36
      $region35: #{tpu_custom_call.1} parent=5 // pred_region
        %s199 = ssub.s32 %s13, 1
        %p200 = scmp.lt.s32.totalorder %s24, 1
        %s201 = scalar_select %p200, %s24, 1
        %p202 = scmp.lt.s32.totalorder %s25, 0
        %s203 = scalar_select %p202, %s25, 0
        %s204 = sadd.s32 %s203, %s201
        %s205 = smul.addr %s204, 2
        %s206 = scalar_lea.vmem %s0, %s205
        %p207 = pneg %p60
        %p208 = pneg %p57
        %p209 = pneg %p81
        %p210 = pneg %p78
        %p211 = pneg %p102
        %p212 = pneg %p99
        %p213 = pneg %p123
        %p214 = pneg %p120
        %p215 = pneg %p155
        %p216 = pneg %p152
        %s217 = sand.u32 %s142, 1
        %s218 = scalar_lea.sflag [#allocation7], %s217
        %s219 = sand.u32 %s142, 1
        %s220 = smul.addr %s219, 8
        %s221 = scalar_lea.vmem [#allocation6], %s220
        %p222 = scmp.lt.s32.totalorder %s24, 1
        %s223 = scalar_select %p222, %s24, 1
        %p224 = scmp.lt.s32.totalorder %s25, 0
        %s225 = scalar_select %p224, %s25, 0
        %s226 = sadd.s32 %s225, %s223
        %s227 = smul.addr %s226, 2
        %s228 = scalar_lea.vmem %s0, %s227
        %s229 = smul.u32 %s24, %s23
        %s230 = smul.u32 %s25, %s23
        %p232 = scmp.eq.s32.totalorder %s24, 0
        %p233 = scmp.eq.s32.totalorder %s25, 0
        %p234 = pnand %p232, %p233
        %p235 = pneg %p234
        %v236 = vld [vmem:[%s1] sm:$0xf]
        %v237 = vld [vmem:[%s228] sm:$0x3]
        %vm238 = vcmask 31744
        %v240 = vsel %vm238, %v236, 0
        %vm242 = vcmask 1041408
        %v244 = vsel %vm242, %v237, 0
        %246 = vmatprep.subr.bf16.mxu0 0
        %247 = vmatpush1.bf16.msra.mxu0 %v244
        %248 = vmatprep.subr.bf16.mxu0 0
        %249 = vmatpush1.bf16.msra.mxu0 0
        %250 = vmatprep.subr.bf16.mxu0 0
        %251 = vmatpush1.bf16.msra.mxu0 0
        %252 = vmatprep.subr.bf16.mxu0 0
        %253 = vmatpush1.bf16.msra.mxu0 0
        %254 = vmatprep.subr.bf16.mxu0 0
        %255 = vmatpush1.bf16.msra.mxu0 0
        %256 = vmatprep.subr.bf16.mxu0 0
        %257 = vmatpush1.bf16.msra.mxu0 0
        %258 = vmatprep.subr.bf16.mxu0 0
        %259 = vmatpush1.bf16.msra.mxu0 0
        %260 = vmatprep.subr.bf16.mxu0 0
        %261 = vmatpush1.bf16.msra.mxu0 0
        %262 = vmatprep.subr.bf16.mxu0 0
        %263 = vmatpush1.bf16.msra.mxu0 0
        %264 = vmatprep.subr.bf16.mxu0 0
        %265 = vmatpush1.bf16.msra.mxu0 0
        %266 = vmatprep.subr.bf16.mxu0 0
        %267 = vmatpush1.bf16.msra.mxu0 0
        %268 = vmatprep.subr.bf16.mxu0 0
        %269 = vmatpush1.bf16.msra.mxu0 0
        %270 = vmatprep.subr.bf16.mxu0 0
        %271 = vmatpush1.bf16.msra.mxu0 0
        %272 = vmatprep.subr.bf16.mxu0 0
        %273 = vmatpush1.bf16.msra.mxu0 0
        %274 = vmatprep.subr.bf16.mxu0 0
        %275 = vmatpush1.bf16.msra.mxu0 0
        %276 = vmatprep.subr.bf16.mxu0 0
        %277 = vmatpush1.bf16.msra.mxu0 0
        %278 = vmatprep.mubr.bf16.mxu0 0
        %279 = vmatmul.mubr.bf16.gmra.mrb[0].mxu0 %v240
        %v280 = vpop.f32.mrb[0].mxu0
        %v281 = vadd.f32 0.0, %v280
        %v282 = vpop.f32.mrb[0].mxu0
        %v283 = vpop.f32.mrb[0].mxu0
        %v284 = vpop.f32.mrb[0].mxu0
        %285 = vdwg.mxu0
        %p286 = scmp.eq.s32.totalorder %s23, 0
        // Predicated region
        $region37: #{tpu_custom_call.1} parent=35 // pred_check
          %p287 = pneg %p286
        $region38: #{tpu_custom_call.1} parent=35 // pred_check_branch
          %289 = sbr.rel (%p287) target = $region40
        $region39: #{tpu_custom_call.1} parent=35 // pred_region
          // Predicated region
          $region41: #{tpu_custom_call.1} parent=39 // pred_check
            _
          $region42: #{tpu_custom_call.1} parent=39 // pred_check_branch
            %291 = sbr.rel (%p234) target = $region44
          $region43: #{tpu_custom_call.1} parent=39 // pred_region
            %vm292 = vcmask 7168
            %293 = vst.msk [vmem:[#allocation2] sm:$0xff] %vm292, 0.0
            %294 = vst.msk [vmem:[#allocation3] sm:$0xff] %vm292, 0.0
          $region44: #{tpu_custom_call.1} parent=39 // pred_fallthru
            _
          %v295 = vld [vmem:[#allocation2] sm:$0xff]
          %vm296 = vcmask 523264
          %v297 = vsel %vm296, %v281, 0.0
          %298 = vadd.xlane.f32.xlu0 %v297
          %v299 = vpop.xlane.xlu0 %298
          %v300 = vadd.f32 %v295, %v299
          %vm301 = vcmask 7168
          %302 = vst.msk [vmem:[#allocation2] sm:$0xff] %vm301, %v300
          %v303 = vld [vmem:[#allocation3] sm:$0xff]
          %v304 = vmul.f32 %v281, %v281
          %v305 = vsel %vm296, %v304, 0.0
          %306 = vadd.xlane.f32.xlu0 %v305
          %v307 = vpop.xlane.xlu0 %306
          %v308 = vadd.f32 %v303, %v307
          %309 = vst.msk [vmem:[#allocation3] sm:$0xff] %vm301, %v308
        $region40: #{tpu_custom_call.1} parent=35 // pred_fallthru
          _
        %p310 = scmp.eq.s32.totalorder %s23, 1
        // Predicated region
        $region45: #{tpu_custom_call.1} parent=35 // pred_check
          %p311 = pneg %p310
        $region46: #{tpu_custom_call.1} parent=35 // pred_check_branch
          %313 = sbr.rel (%p311) target = $region48
        $region47: #{tpu_custom_call.1} parent=35 // pred_region
          // Predicated region
          $region49: #{tpu_custom_call.1} parent=47 // pred_check
            _
          $region50: #{tpu_custom_call.1} parent=47 // pred_check_branch
            %315 = sbr.rel (%p234) target = $region52
          $region51: #{tpu_custom_call.1} parent=47 // pred_region
            %v316 = vld [vmem:[#allocation2] sm:$0xff]
            %v317 = vmul.f32 %v316, 0.0078125
            %v318 = vld [vmem:[#allocation3] sm:$0xff]
            %v319 = vmul.f32 %v318, 0.0078125
            %v320 = vmul.f32 %v317, %v317
            %v321 = vsub.f32 %v319, %v320
            %v322 = vld [vmem:[%s2] sm:$0xff]
            %v323 = vadd.f32 %v321, 1e-05
            %v324 = vrsqrt.pop %v323
            %v325 = vmul.f32 %v322, %v324
            %vm326 = vcmask 7168
            %327 = vst.msk [vmem:[#allocation4] sm:$0xff] %vm326, %v325
            %v328 = vld [vmem:[%s3] sm:$0xff]
            %v329 = vmul.f32 %v317, %v325
            %v330 = vsub.f32 %v328, %v329
            %331 = vst.msk [vmem:[#allocation5] sm:$0xff] %vm326, %v330
          $region52: #{tpu_custom_call.1} parent=47 // pred_fallthru
            _
          %v332 = vld [vmem:[#allocation4] sm:$0xff]
          %334 = vset.pattern.permute.xlu0 0
          %335 = vperm.xlu0 %334, %v332
          %v336 = vpop.permute.xlu0 %335
          %v338 = vmul.f32 %v281, %v336
          %v339 = vld [vmem:[#allocation5] sm:$0xff]
          %341 = vset.pattern.permute.xlu0 0
          %342 = vperm.xlu0 %341, %v339
          %v343 = vpop.permute.xlu0 %342
          %v345 = vadd.f32 %v338, %v343
          %vm346 = vcmask 523264
          %347 = vst.msk [vmem:[%s221] sm:$0xff] %vm346, %v345
        $region48: #{tpu_custom_call.1} parent=35 // pred_fallthru
          _
        %s348 = sand.u32 %s142, 1
        %s349 = scalar_lea.sflag [#allocation7], %s348
        %s350 = sand.u32 %s142, 1
        %s351 = smul.addr %s350, 8
        %s352 = scalar_lea.vmem [#allocation6], %s351
        // Predicated region
        $region53: #{tpu_custom_call.1} parent=35 // pred_check
          %p353 = pneg %p152
        $region54: #{tpu_custom_call.1} parent=35 // pred_check_branch
          %355 = sbr.rel (%p353) target = $region56
        $region55: #{tpu_custom_call.1} parent=35 // pred_region
          %s356 = smul.u32 %s24, %s23
          %s357 = smul.u32 %s25, %s23
          %s359 = ssub.s32 128, 128
          %360 = vsyncadd %s349, %s359
          %s361 = sadd.s32 %s357, %s356
          %s362 = smul.addr %s361, 128
          %s363 = scalar_lea.hbm %s4, %s362
          %s365 = sshll.u32 %s352, 4
          %s366 = int_to_ptr.vmem [resolvable:$true] %s365
          %368 = dma.vmem_to_hbm [thread:$0]  %s366, 128, %s363, %s349
        $region56: #{tpu_custom_call.1} parent=35 // pred_fallthru
          _
      $region36: #{tpu_custom_call.1} parent=5 // pred_fallthru
        _
      %p369 = scmp.le.s32.totalorder 2, %s13
      // Predicated region
      $region57: #{tpu_custom_call.1} parent=5 // pred_check
        %p370 = pneg %p369
      $region58: #{tpu_custom_call.1} parent=5 // pred_check_branch
        %372 = sbr.rel (%p370) target = $region60
      $region59: #{tpu_custom_call.1} parent=5 // pred_region
        %s373 = ssub.s32 %s13, 2
        // Predicated region
        $region61: #{tpu_custom_call.1} parent=59 // pred_check
          %p374 = pneg %p158
        $region62: #{tpu_custom_call.1} parent=59 // pred_check_branch
          %376 = sbr.rel (%p374) target = $region64
        $region63: #{tpu_custom_call.1} parent=59 // pred_region
          %s377 = sand.u32 %s143, 1
          %s378 = scalar_lea.sflag [#allocation7], %s377
          %s379 = sand.u32 %s143, 1
          %s380 = smul.addr %s379, 8
          %s381 = scalar_lea.vmem [#allocation6], %s380
          %382 = dma.done %s378, 128
        $region64: #{tpu_custom_call.1} parent=59 // pred_fallthru
          _
      $region60: #{tpu_custom_call.1} parent=5 // pred_fallthru
        _
    $region6: #{tpu_custom_call.1} parent=1 // loop_footer
      %s17 = sadd.s32 1, %s13
    $region7: #{tpu_custom_call.1} parent=1 // loop_footer_branch
      %12 = sbr.rel target = $region3
    $region8: #{tpu_custom_call.1} parent=1 // loop_exit
      _
    %383 = vsyncpa [#allocation7], 1
    %s384 = scalar_lea.sflag [#allocation7], 1
    %385 = vsyncpa %s384, 1

</llo_original>
